<compile_context>
chip_gen: v5e
topology: v5e:2x2
jax: 0.10.0
libtpu: 0.0.40
codegen_flags: <defaults>
</compile_context>

<pallas_src>
import functools

import jax
import jax.numpy as jnp
from jax.experimental import pallas as pl
from jax.experimental.pallas import tpu as pltpu


HIDDEN = 64            # per-network hidden width (PyTorch module uses 64)
LANE = 128             # TPU lane width
ROW_TILE_CAP = 1024    # max rows per grid step


def _round_up(x, m):
    return (x + m - 1) // m * m


def _rnd_fused_kernel(x_ref, w1_ref, b1_ref, w2_ref, b2_ref, w3_ref, b3_ref, o_ref):
    """Both MLPs at once on packed / block-diagonal bf16 weights, f32 accumulation.

    h1 = relu(x @ W1_cat + b1)         # (tile_b, 128): [:, :64] target, [:, 64:] predictor
    h2 = relu(h1 @ W2_blockdiag + b2)  # (tile_b, 128)
    o  = h2 @ W3_packed + b3           # (tile_b, slab): target cols [0,out), pred [out,2*out)
    """
    x = x_ref[...].astype(jnp.bfloat16)
    h1 = jnp.dot(x, w1_ref[...], preferred_element_type=jnp.float32) + b1_ref[...]
    h1 = jnp.maximum(h1, 0.0).astype(jnp.bfloat16)
    h2 = jnp.dot(h1, w2_ref[...], preferred_element_type=jnp.float32) + b2_ref[...]
    h2 = jnp.maximum(h2, 0.0).astype(jnp.bfloat16)
    out = jnp.dot(h2, w3_ref[...], preferred_element_type=jnp.float32) + b3_ref[...]
    o_ref[...] = out.astype(o_ref.dtype)


@functools.partial(jax.jit, static_argnames=("out_dim",))
def _rnd_packed_forward(x, w1, b1, w2, b2, w3, b3, *, out_dim):
    """Runs the fused kernel and returns (target_feature, predict_feature)."""
    B, in_dim = x.shape
    slab = w3.shape[1]  # round_up(2*out_dim, 128)

    # Row tiling: cap tile at ROW_TILE_CAP rows, balance tiles across the batch,
    # round each tile to 8 sublanes.  Pads at most 8*num_tiles - 1 dead rows.
    num_tiles = max(1, pl.cdiv(B, ROW_TILE_CAP))
    tile_b = _round_up(pl.cdiv(B, num_tiles), 8)
    Bp = num_tiles * tile_b
    if Bp != B:
        x = jnp.pad(x, ((0, Bp - B), (0, 0)))

    out = pl.pallas_call(
        _rnd_fused_kernel,
        out_shape=jax.ShapeDtypeStruct((Bp, slab), jnp.float32),
        grid_spec=pltpu.PrefetchScalarGridSpec(
            num_scalar_prefetch=0,
            grid=(num_tiles,),
            in_specs=[
                pl.BlockSpec((tile_b, in_dim), lambda i: (i, 0)),   # x: streamed
                pl.BlockSpec(w1.shape, lambda i: (0, 0)),           # packed weights:
                pl.BlockSpec(b1.shape, lambda i: (0, 0)),           #  VMEM-resident
                pl.BlockSpec(w2.shape, lambda i: (0, 0)),
                pl.BlockSpec(b2.shape, lambda i: (0, 0)),
                pl.BlockSpec(w3.shape, lambda i: (0, 0)),
                pl.BlockSpec(b3.shape, lambda i: (0, 0)),
            ],
            out_specs=pl.BlockSpec((tile_b, slab), lambda i: (i, 0)),
        ),
        compiler_params=pltpu.CompilerParams(
            dimension_semantics=("parallel",)),
    )(x, w1, b1, w2, b2, w3, b3)

    # Trim padding rows + split the two features inside the jit (fused by XLA).
    out = out[:B]
    target_feature = out[:, :out_dim]
    predict_feature = out[:, out_dim:2 * out_dim]
    return target_feature, predict_feature


# ----------------------------------------------------------------------------
# Parameter init (mimics PyTorch nn.Linear default) and one-time packing.
# ----------------------------------------------------------------------------

def init_linear_params(key, in_features, out_features):
    """Weight stored as (in, out) = PyTorch weight.T; bias as (1, out)."""
    kw, kb = jax.random.split(key)
    bound = 1.0 / jnp.sqrt(in_features)
    w = jax.random.uniform(kw, (in_features, out_features), jnp.float32, -bound, bound)
    b = jax.random.uniform(kb, (1, out_features), jnp.float32, -bound, bound)
    return w, b


def init_rnd_params(key, input_size, output_size, hidden=HIDDEN):
    keys = jax.random.split(key, 6)
    target = (
        *init_linear_params(keys[0], input_size, hidden),
        *init_linear_params(keys[1], hidden, hidden),
        *init_linear_params(keys[2], hidden, output_size),
    )
    predictor = (
        *init_linear_params(keys[3], input_size, hidden),
        *init_linear_params(keys[4], hidden, hidden),
        *init_linear_params(keys[5], hidden, output_size),
    )
    return target, predictor


def pack_rnd_params(target_params, predictor_params, compute_dtype=jnp.bfloat16):
    """Pack the two 3-layer MLPs into 3 lane-dense weight slabs (do this ONCE).

    W1: (in, 2H) concat               | b1: (1, 2H)
    W2: (2H, 2H) block-diagonal       | b2: (1, 2H)
    W3: (2H, slab), slab = round_up(2*out, 128); target output in cols [0, out),
        predictor output in cols [out, 2*out); remaining lanes zero.
    Weights are stored in `compute_dtype` (bf16 MXU inputs); biases stay f32.
    """
    w1_t, b1_t, w2_t, b2_t, w3_t, b3_t = target_params
    w1_p, b1_p, w2_p, b2_p, w3_p, b3_p = predictor_params
    H = w1_t.shape[1]
    out_dim = w3_t.shape[1]
    slab = _round_up(2 * out_dim, LANE)

    W1 = jnp.concatenate([w1_t, w1_p], axis=1).astype(compute_dtype)   # (in, 2H)
    B1 = jnp.concatenate([b1_t, b1_p], axis=1)                         # (1, 2H) f32

    zH = jnp.zeros((H, H), jnp.float32)
    W2 = jnp.block([[w2_t, zH], [zH, w2_p]]).astype(compute_dtype)     # (2H, 2H)
    B2 = jnp.concatenate([b2_t, b2_p], axis=1)                         # (1, 2H) f32

    W3 = jnp.zeros((2 * H, slab), jnp.float32)
    W3 = W3.at[:H, :out_dim].set(w3_t)
    W3 = W3.at[H:, out_dim:2 * out_dim].set(w3_p)
    W3 = W3.astype(compute_dtype)                                      # (2H, slab)
    B3 = jnp.zeros((1, slab), jnp.float32)
    B3 = B3.at[:, :out_dim].set(b3_t[0])
    B3 = B3.at[:, out_dim:2 * out_dim].set(b3_p[0])                    # (1, slab) f32

    return (W1, B1, W2, B2, W3, B3), out_dim


def rnd_forward(x, packed):
    """Equivalent of RND.forward: returns (target_feature, predict_feature)."""
    (W1, B1, W2, B2, W3, B3), out_dim = packed
    return _rnd_packed_forward(x, W1, B1, W2, B2, W3, B3, out_dim=out_dim)


if __name__ == "__main__":
    key = jax.random.PRNGKey(0)
    k_x, k_params = jax.random.split(key)

    batch = 8
    input_size = 32
    output_size = 32

    x = jax.random.normal(k_x, (batch, input_size), dtype=jnp.float32)
    target_params, predictor_params = init_rnd_params(k_params, input_size, output_size)

    # One-time packing of the 12 small arrays into 6 lane-dense slabs.
    packed = pack_rnd_params(target_params, predictor_params)

    target_feature, predict_feature = rnd_forward(x, packed)
    jax.block_until_ready((target_feature, predict_feature))

    # Reference check in plain JAX f32 (same math, unpacked weights).
    # Kernel uses bf16 matmul inputs with f32 accumulation -> loose tolerance.
    def ref_mlp(x, w1, b1, w2, b2, w3, b3):
        h1 = jnp.maximum(x @ w1 + b1, 0.0)
        h2 = jnp.maximum(h1 @ w2 + b2, 0.0)
        return h2 @ w3 + b3

    ref_t = ref_mlp(x, *target_params)
    ref_p = ref_mlp(x, *predictor_params)
    assert target_feature.shape == (batch, output_size)
    assert predict_feature.shape == (batch, output_size)
    assert jnp.allclose(target_feature, ref_t, atol=5e-2, rtol=5e-2)
    assert jnp.allclose(predict_feature, ref_p, atol=5e-2, rtol=5e-2)

    # Also exercise the multi-tile grid path with an awkward batch size
    # (1030 -> two 520-row tiles, only 10 padded rows).
    big_x = jax.random.normal(k_x, (1030, input_size), dtype=jnp.float32)
    bt, bp = rnd_forward(big_x, packed)
    jax.block_until_ready((bt, bp))
    assert bt.shape == (1030, output_size) and bp.shape == (1030, output_size)
    assert jnp.allclose(bt, ref_mlp(big_x, *target_params), atol=5e-2, rtol=5e-2)
    assert jnp.allclose(bp, ref_mlp(big_x, *predictor_params), atol=5e-2, rtol=5e-2)

    print("KERNEL_OK")
</pallas_src>

<mosaic_0001>
module attributes {stable_mosaic.version = 11 : i64} {
  func.func @_rnd_fused_kernel(%arg0: i32, %arg1: memref<8x32xf32, #tpu.memory_space<vmem>>, %arg2: memref<32x128xbf16, #tpu.memory_space<vmem>>, %arg3: memref<1x128xf32, #tpu.memory_space<vmem>>, %arg4: memref<128x128xbf16, #tpu.memory_space<vmem>>, %arg5: memref<1x128xf32, #tpu.memory_space<vmem>>, %arg6: memref<128x128xbf16, #tpu.memory_space<vmem>>, %arg7: memref<1x128xf32, #tpu.memory_space<vmem>>, %arg8: memref<8x128xf32, #tpu.memory_space<vmem>>) attributes {dimension_semantics = [#tpu.dimension_semantics<parallel>], iteration_bounds = array<i64: 1>, scalar_prefetch = 0 : i64, scratch_operands = 0 : i64, tpu.core_type = #tpu.core_type<tc>, window_params = [{transform_indices = @transform_0, window_bounds = array<i64: 8, 32>}, {pipeline_mode = #tpu.pipeline_mode<synchronous>, transform_indices = @transform_1, window_bounds = array<i64: 32, 128>}, {pipeline_mode = #tpu.pipeline_mode<synchronous>, transform_indices = @transform_2, window_bounds = array<i64: 1, 128>}, {pipeline_mode = #tpu.pipeline_mode<synchronous>, transform_indices = @transform_3, window_bounds = array<i64: 128, 128>}, {pipeline_mode = #tpu.pipeline_mode<synchronous>, transform_indices = @transform_4, window_bounds = array<i64: 1, 128>}, {pipeline_mode = #tpu.pipeline_mode<synchronous>, transform_indices = @transform_5, window_bounds = array<i64: 128, 128>}, {pipeline_mode = #tpu.pipeline_mode<synchronous>, transform_indices = @transform_6, window_bounds = array<i64: 1, 128>}, {transform_indices = @transform_7, window_bounds = array<i64: 8, 128>}]} {
    %c0 = arith.constant 0 : index
    %c0_0 = arith.constant 0 : index
    %0 = vector.load %arg1[%c0, %c0_0] : memref<8x32xf32, #tpu.memory_space<vmem>>, vector<8x32xf32>
    %1 = arith.truncf %0 : vector<8x32xf32> to vector<8x32xbf16>
    %c0_1 = arith.constant 0 : index
    %c0_2 = arith.constant 0 : index
    %2 = vector.load %arg2[%c0_1, %c0_2] : memref<32x128xbf16, #tpu.memory_space<vmem>>, vector<32x128xbf16>
    %cst = arith.constant dense<0.000000e+00> : vector<8x128xf32>
    %3 = tpu.matmul %1, %2, %cst {dimension_numbers = #tpu.dot_dimension_numbers<[1], [0], [0], [1], [0, 0, 1, 1], [], []>} : vector<8x32xbf16>, vector<32x128xbf16>, vector<8x128xf32> -> vector<8x128xf32>
    %c0_3 = arith.constant 0 : index
    %c0_4 = arith.constant 0 : index
    %4 = vector.load %arg3[%c0_3, %c0_4] : memref<1x128xf32, #tpu.memory_space<vmem>>, vector<1x128xf32>
    %5 = vector.broadcast %4 : vector<1x128xf32> to vector<8x128xf32>
    %6 = arith.addf %3, %5 : vector<8x128xf32>
    %cst_5 = arith.constant 0.000000e+00 : f32
    %7 = vector.broadcast %cst_5 : f32 to vector<8x128xf32>
    %8 = arith.maximumf %6, %7 : vector<8x128xf32>
    %9 = arith.truncf %8 : vector<8x128xf32> to vector<8x128xbf16>
    %c0_6 = arith.constant 0 : index
    %c0_7 = arith.constant 0 : index
    %10 = vector.load %arg4[%c0_6, %c0_7] : memref<128x128xbf16, #tpu.memory_space<vmem>>, vector<128x128xbf16>
    %cst_8 = arith.constant dense<0.000000e+00> : vector<8x128xf32>
    %11 = tpu.matmul %9, %10, %cst_8 {dimension_numbers = #tpu.dot_dimension_numbers<[1], [0], [0], [1], [0, 0, 1, 1], [], []>} : vector<8x128xbf16>, vector<128x128xbf16>, vector<8x128xf32> -> vector<8x128xf32>
    %c0_9 = arith.constant 0 : index
    %c0_10 = arith.constant 0 : index
    %12 = vector.load %arg5[%c0_9, %c0_10] : memref<1x128xf32, #tpu.memory_space<vmem>>, vector<1x128xf32>
    %13 = vector.broadcast %12 : vector<1x128xf32> to vector<8x128xf32>
    %14 = arith.addf %11, %13 : vector<8x128xf32>
    %cst_11 = arith.constant 0.000000e+00 : f32
    %15 = vector.broadcast %cst_11 : f32 to vector<8x128xf32>
    %16 = arith.maximumf %14, %15 : vector<8x128xf32>
    %17 = arith.truncf %16 : vector<8x128xf32> to vector<8x128xbf16>
    %c0_12 = arith.constant 0 : index
    %c0_13 = arith.constant 0 : index
    %18 = vector.load %arg6[%c0_12, %c0_13] : memref<128x128xbf16, #tpu.memory_space<vmem>>, vector<128x128xbf16>
    %cst_14 = arith.constant dense<0.000000e+00> : vector<8x128xf32>
    %19 = tpu.matmul %17, %18, %cst_14 {dimension_numbers = #tpu.dot_dimension_numbers<[1], [0], [0], [1], [0, 0, 1, 1], [], []>} : vector<8x128xbf16>, vector<128x128xbf16>, vector<8x128xf32> -> vector<8x128xf32>
    %c0_15 = arith.constant 0 : index
    %c0_16 = arith.constant 0 : index
    %20 = vector.load %arg7[%c0_15, %c0_16] : memref<1x128xf32, #tpu.memory_space<vmem>>, vector<1x128xf32>
    %21 = vector.broadcast %20 : vector<1x128xf32> to vector<8x128xf32>
    %22 = arith.addf %19, %21 : vector<8x128xf32>
    %c0_17 = arith.constant 0 : index
    %c0_18 = arith.constant 0 : index
    %23 = vector.load %arg8[%c0_17, %c0_18] : memref<8x128xf32, #tpu.memory_space<vmem>>, vector<8x128xf32>
    tpu.vector_store %arg8[%c0_17, %c0_18], %22 {strides = array<i32>} : memref<8x128xf32, #tpu.memory_space<vmem>>, vector<8x128xf32>,
    return
  }
  func.func @transform_0(%arg0: i32) -> (i32, i32) {
    %c0_i32 = arith.constant 0 : i32
    %c0_i32_0 = arith.constant 0 : i32
    return %arg0, %c0_i32 : i32, i32
  }
  func.func @transform_1(%arg0: i32) -> (i32, i32) {
    %c0_i32 = arith.constant 0 : i32
    %c0_i32_0 = arith.constant 0 : i32
    %c0_i32_1 = arith.constant 0 : i32
    return %c0_i32, %c0_i32_0 : i32, i32
  }
  func.func @transform_2(%arg0: i32) -> (i32, i32) {
    %c0_i32 = arith.constant 0 : i32
    %c0_i32_0 = arith.constant 0 : i32
    %c0_i32_1 = arith.constant 0 : i32
    return %c0_i32, %c0_i32_0 : i32, i32
  }
  func.func @transform_3(%arg0: i32) -> (i32, i32) {
    %c0_i32 = arith.constant 0 : i32
    %c0_i32_0 = arith.constant 0 : i32
    %c0_i32_1 = arith.constant 0 : i32
    return %c0_i32, %c0_i32_0 : i32, i32
  }
  func.func @transform_4(%arg0: i32) -> (i32, i32) {
    %c0_i32 = arith.constant 0 : i32
    %c0_i32_0 = arith.constant 0 : i32
    %c0_i32_1 = arith.constant 0 : i32
    return %c0_i32, %c0_i32_0 : i32, i32
  }
  func.func @transform_5(%arg0: i32) -> (i32, i32) {
    %c0_i32 = arith.constant 0 : i32
    %c0_i32_0 = arith.constant 0 : i32
    %c0_i32_1 = arith.constant 0 : i32
    return %c0_i32, %c0_i32_0 : i32, i32
  }
  func.func @transform_6(%arg0: i32) -> (i32, i32) {
    %c0_i32 = arith.constant 0 : i32
    %c0_i32_0 = arith.constant 0 : i32
    %c0_i32_1 = arith.constant 0 : i32
    return %c0_i32, %c0_i32_0 : i32, i32
  }
  func.func @transform_7(%arg0: i32) -> (i32, i32) {
    %c0_i32 = arith.constant 0 : i32
    %c0_i32_0 = arith.constant 0 : i32
    return %arg0, %c0_i32 : i32, i32
  }
}

</mosaic_0001>

<llo_original>
// kernel: _rnd_packed_forward.1
$region0: #{_rnd_packed_forward.1}
  #allocation0 [shape = 'u32[]', space=smem, size = 0x4, offset = 0x4, fixed_abs, tag = 'smem constant byte address 0x4 - core index']
  #allocation1 [shape = 'u32[72,128]{1,0:T(1,128)}', space=vmem, size = 0x9000, scoped, tag = 'internal scratch']
  %s0 = inlined_call_operand.hbm [shape: f32[8,32], index: 0, kind: input, shape index: {}]
  %s1 = inlined_call_operand.hbm [shape: bf16[32,128], index: 1, kind: input, shape index: {}]
  %s2 = inlined_call_operand.vmem [shape: f32[1,128], index: 2, kind: input, shape index: {}]
  %s3 = inlined_call_operand.hbm [shape: bf16[128,128], index: 3, kind: input, shape index: {}]
  %s4 = inlined_call_operand.vmem [shape: f32[1,128], index: 4, kind: input, shape index: {}]
  %s5 = inlined_call_operand.hbm [shape: bf16[128,128], index: 5, kind: input, shape index: {}]
  %s6 = inlined_call_operand.vmem [shape: f32[1,128], index: 6, kind: input, shape index: {}]
  %s7 = inlined_call_operand.vmem [shape: f32[8,128], index: 7, kind: output, shape index: {}]
  %s8 = sld [smem:[#allocation0]]
  $region54: #{_rnd_packed_forward.1} parent=0
    _
  %s10 = ssub.s32 1, %s8
  %s11 = scalar_select 0, %s10, %s8
  $region1: #{_rnd_packed_forward.1} parent=0
    #allocation2 [shape = 'u8[4096]{0}', space=vmem, size = 0x1000, scoped, tag = 'input window, operand 0, single buffered']
    #allocation3 [shape = 's32[1]{0}', space=sflag, size = 0x4, scoped, tag = 'scoped memory for _rnd_packed_forward.1']
    #allocation4 [shape = 'u8[8192]{0}', space=vmem, size = 0x2000, scoped, tag = 'input window, operand 1, single buffered']
    #allocation5 [shape = 's32[1]{0}', space=sflag, size = 0x4, scoped, tag = 'scoped memory for _rnd_packed_forward.1']
    #allocation6 [shape = 'u8[32768]{0}', space=vmem, size = 0x8000, scoped, tag = 'input window, operand 3, single buffered']
    #allocation7 [shape = 'u8[32768]{0}', space=vmem, size = 0x8000, scoped, tag = 'input window, operand 5, single buffered']
    #allocation8 [shape = 's32[1]{0}', space=sflag, size = 0x4, scoped, tag = 'scoped memory for _rnd_packed_forward.1']
    %12 = vsyncpa [#allocation3], 0
    %13 = vsyncpa [#allocation5], 0
    %14 = vsyncpa [#allocation8], 0
    // Predicated region
    $region2: #{_rnd_packed_forward.1} parent=1 // pred_check
      _
    $region3: #{_rnd_packed_forward.1} parent=1 // pred_check_branch
      %16 = sbr.rel (0) target = $region5
    $region4: #{_rnd_packed_forward.1} parent=1 // pred_region
      %18 = vsyncadd [#allocation3], 0
      %s20 = sshll.u32 %s0, 4
      %s21 = int_to_ptr.hbm [resolvable:$true] %s20
      %s22 = sshll.u32 [#allocation2], 4
      %s23 = int_to_ptr.vmem [resolvable:$true] %s22
      %25 = dma.hbm_to_vmem [thread:$0]  %s21, 128, %s23, [#allocation3]
    $region5: #{_rnd_packed_forward.1} parent=1 // pred_fallthru
      _
    // Predicated region
    $region6: #{_rnd_packed_forward.1} parent=1 // pred_check
      _
    $region7: #{_rnd_packed_forward.1} parent=1 // pred_check_branch
      %27 = sbr.rel (0) target = $region9
    $region8: #{_rnd_packed_forward.1} parent=1 // pred_region
      %29 = vsyncadd [#allocation5], 0
      %s30 = sshll.u32 %s1, 4
      %s31 = int_to_ptr.hbm [resolvable:$true] %s30
      %s32 = sshll.u32 [#allocation4], 4
      %s33 = int_to_ptr.vmem [resolvable:$true] %s32
      %38 = dma.hbm_to_vmem [thread:$0]  %s31, 256, %s33, [#allocation5], 64, 64, 4
    $region9: #{_rnd_packed_forward.1} parent=1 // pred_fallthru
      _
    // Predicated region
    $region10: #{_rnd_packed_forward.1} parent=1 // pred_check
      _
    $region11: #{_rnd_packed_forward.1} parent=1 // pred_check_branch
      %40 = sbr.rel (0) target = $region13
    $region12: #{_rnd_packed_forward.1} parent=1 // pred_region
      _
    $region13: #{_rnd_packed_forward.1} parent=1 // pred_fallthru
      _
    // Predicated region
    $region14: #{_rnd_packed_forward.1} parent=1 // pred_check
      _
    $region15: #{_rnd_packed_forward.1} parent=1 // pred_check_branch
      %42 = sbr.rel (0) target = $region17
    $region16: #{_rnd_packed_forward.1} parent=1 // pred_region
      %44 = vsyncadd [#allocation5], 0
      %s45 = sshll.u32 %s3, 4
      %s46 = int_to_ptr.hbm [resolvable:$true] %s45
      %s47 = sshll.u32 [#allocation6], 4
      %s48 = int_to_ptr.vmem [resolvable:$true] %s47
      %53 = dma.hbm_to_vmem [thread:$0]  %s46, 1024, %s48, [#allocation5], 64, 64, 4
    $region17: #{_rnd_packed_forward.1} parent=1 // pred_fallthru
      _
    // Predicated region
    $region18: #{_rnd_packed_forward.1} parent=1 // pred_check
      _
    $region19: #{_rnd_packed_forward.1} parent=1 // pred_check_branch
      %55 = sbr.rel (0) target = $region21
    $region20: #{_rnd_packed_forward.1} parent=1 // pred_region
      _
    $region21: #{_rnd_packed_forward.1} parent=1 // pred_fallthru
      _
    // Predicated region
    $region22: #{_rnd_packed_forward.1} parent=1 // pred_check
      _
    $region23: #{_rnd_packed_forward.1} parent=1 // pred_check_branch
      %57 = sbr.rel (0) target = $region25
    $region24: #{_rnd_packed_forward.1} parent=1 // pred_region
      %59 = vsyncadd [#allocation8], 0
      %s60 = sshll.u32 %s5, 4
      %s61 = int_to_ptr.hbm [resolvable:$true] %s60
      %s62 = sshll.u32 [#allocation7], 4
      %s63 = int_to_ptr.vmem [resolvable:$true] %s62
      %68 = dma.hbm_to_vmem [thread:$0]  %s61, 1024, %s63, [#allocation8], 64, 64, 4
    $region25: #{_rnd_packed_forward.1} parent=1 // pred_fallthru
      _
    // Predicated region
    $region26: #{_rnd_packed_forward.1} parent=1 // pred_check
      _
    $region27: #{_rnd_packed_forward.1} parent=1 // pred_check_branch
      %70 = sbr.rel (0) target = $region29
    $region28: #{_rnd_packed_forward.1} parent=1 // pred_region
      _
    $region29: #{_rnd_packed_forward.1} parent=1 // pred_fallthru
      _
    // Predicated region
    $region30: #{_rnd_packed_forward.1} parent=1 // pred_check
      _
    $region31: #{_rnd_packed_forward.1} parent=1 // pred_check_branch
      %72 = sbr.rel (0) target = $region33
    $region32: #{_rnd_packed_forward.1} parent=1 // pred_region
      %74 = dma.done [#allocation3], 128
    $region33: #{_rnd_packed_forward.1} parent=1 // pred_fallthru
      _
    // Predicated region
    $region34: #{_rnd_packed_forward.1} parent=1 // pred_check
      _
    $region35: #{_rnd_packed_forward.1} parent=1 // pred_check_branch
      %76 = sbr.rel (0) target = $region37
    $region36: #{_rnd_packed_forward.1} parent=1 // pred_region
      %78 = dma.done [#allocation5], 256
    $region37: #{_rnd_packed_forward.1} parent=1 // pred_fallthru
      _
    // Predicated region
    $region38: #{_rnd_packed_forward.1} parent=1 // pred_check
      _
    $region39: #{_rnd_packed_forward.1} parent=1 // pred_check_branch
      %80 = sbr.rel (0) target = $region41
    $region40: #{_rnd_packed_forward.1} parent=1 // pred_region
      %82 = dma.done [#allocation5], 1024
    $region41: #{_rnd_packed_forward.1} parent=1 // pred_fallthru
      _
    // Predicated region
    $region42: #{_rnd_packed_forward.1} parent=1 // pred_check
      _
    $region43: #{_rnd_packed_forward.1} parent=1 // pred_check_branch
      %84 = sbr.rel (0) target = $region45
    $region44: #{_rnd_packed_forward.1} parent=1 // pred_region
      %86 = dma.done [#allocation8], 1024
    $region45: #{_rnd_packed_forward.1} parent=1 // pred_fallthru
      _
    %v88 = vld [vmem:[#allocation2] sm:$0xff]
    %v89 = vpack.c.bf16 %v88, %v88
    %v90 = vld [vmem:[#allocation4] sm:$0xf]
    %v91 = vld [vmem:[#allocation4 + $0x4] sm:$0xf]
    %v92 = vld [vmem:[#allocation4 + $0x8] sm:$0xf]
    %v93 = vld [vmem:[#allocation4 + $0xc] sm:$0xf]
    %v94 = vld [vmem:[%s2] sm:$0x1]
    %v96 = vperm.slane %v94, 0
    %v102 = vunpack.c.l.b16 %v90
    %v103 = vunpack.c.l.b16 %v91
    %v104 = vunpack.c.l.b16 %v92
    %v105 = vunpack.c.l.b16 %v93
    %v106 = vpack.c.b16 %v103, %v102
    %v107 = vpack.c.b16 %v105, %v104
    %vm110 = vcmask 261120
    %v112 = vsel %vm110, %v89, 0
    %114 = vmatpush.bf16.msra.mxu0 0
    %115 = vmatpush.bf16.msra.mxu0 0
    %116 = vmatpush.bf16.msra.mxu0 0
    %117 = vmatpush.bf16.msra.mxu0 0
    %118 = vmatpush.bf16.msra.mxu0 0
    %119 = vmatpush.bf16.msra.mxu0 0
    %120 = vmatpush.bf16.msra.mxu0 %v107
    %121 = vmatpush.bf16.msra.mxu0 %v106
    %122 = vmatmul.bf16.gmra.mxu0 %v112
    %v123 = vpop.f32.mrf.mxu0
    %v124 = vadd.f32 %v96, %v123
    %v125 = vpop.f32.mrf.mxu0
    %126 = vdwg.mxu0
    %v127 = vmax.f32 %v124, 0.0
    %v128 = vpack.c.bf16 %v127, %v127
    %v129 = vld [vmem:[#allocation6] sm:$0xf]
    %v130 = vld [vmem:[#allocation6 + $0x4] sm:$0xf]
    %v131 = vld [vmem:[#allocation6 + $0x8] sm:$0xf]
    %v132 = vld [vmem:[#allocation6 + $0xc] sm:$0xf]
    %v133 = vld [vmem:[#allocation6 + $0x10] sm:$0xf]
    %v134 = vld [vmem:[#allocation6 + $0x14] sm:$0xf]
    %v135 = vld [vmem:[#allocation6 + $0x18] sm:$0xf]
    %v136 = vld [vmem:[#allocation6 + $0x1c] sm:$0xf]
    %v137 = vld [vmem:[#allocation6 + $0x20] sm:$0xf]
    %v138 = vld [vmem:[#allocation6 + $0x24] sm:$0xf]
    %v139 = vld [vmem:[#allocation6 + $0x28] sm:$0xf]
    %v140 = vld [vmem:[#allocation6 + $0x2c] sm:$0xf]
    %v141 = vld [vmem:[#allocation6 + $0x30] sm:$0xf]
    %v142 = vld [vmem:[#allocation6 + $0x34] sm:$0xf]
    %v143 = vld [vmem:[#allocation6 + $0x38] sm:$0xf]
    %v144 = vld [vmem:[#allocation6 + $0x3c] sm:$0xf]
    %v145 = vld [vmem:[%s4] sm:$0x1]
    %v147 = vperm.slane %v145, 0
    %v165 = vunpack.c.l.b16 %v129
    %v166 = vunpack.c.l.b16 %v130
    %v167 = vunpack.c.l.b16 %v131
    %v168 = vunpack.c.l.b16 %v132
    %v169 = vunpack.c.l.b16 %v133
    %v170 = vunpack.c.l.b16 %v134
    %v171 = vunpack.c.l.b16 %v135
    %v172 = vunpack.c.l.b16 %v136
    %v173 = vunpack.c.l.b16 %v137
    %v174 = vunpack.c.l.b16 %v138
    %v175 = vunpack.c.l.b16 %v139
    %v176 = vunpack.c.l.b16 %v140
    %v177 = vunpack.c.l.b16 %v141
    %v178 = vunpack.c.l.b16 %v142
    %v179 = vunpack.c.l.b16 %v143
    %v180 = vunpack.c.l.b16 %v144
    %v181 = vpack.c.b16 %v166, %v165
    %v182 = vpack.c.b16 %v168, %v167
    %v183 = vpack.c.b16 %v170, %v169
    %v184 = vpack.c.b16 %v172, %v171
    %v185 = vpack.c.b16 %v174, %v173
    %v186 = vpack.c.b16 %v176, %v175
    %v187 = vpack.c.b16 %v178, %v177
    %v188 = vpack.c.b16 %v180, %v179
    %197 = vmatpush.bf16.msra.mxu0 %v188
    %198 = vmatpush.bf16.msra.mxu0 %v187
    %199 = vmatpush.bf16.msra.mxu0 %v186
    %200 = vmatpush.bf16.msra.mxu0 %v185
    %201 = vmatpush.bf16.msra.mxu0 %v184
    %202 = vmatpush.bf16.msra.mxu0 %v183
    %203 = vmatpush.bf16.msra.mxu0 %v182
    %204 = vmatpush.bf16.msra.mxu0 %v181
    %205 = vmatmul.bf16.gmra.mxu0 %v128
    %v206 = vpop.f32.mrf.mxu0
    %v207 = vadd.f32 %v147, %v206
    %v208 = vpop.f32.mrf.mxu0
    %209 = vdwg.mxu0
    %v210 = vmax.f32 %v207, 0.0
    %v211 = vpack.c.bf16 %v210, %v210
    %v212 = vld [vmem:[#allocation7] sm:$0xf]
    %v213 = vld [vmem:[#allocation7 + $0x4] sm:$0xf]
    %v214 = vld [vmem:[#allocation7 + $0x8] sm:$0xf]
    %v215 = vld [vmem:[#allocation7 + $0xc] sm:$0xf]
    %v216 = vld [vmem:[#allocation7 + $0x10] sm:$0xf]
    %v217 = vld [vmem:[#allocation7 + $0x14] sm:$0xf]
    %v218 = vld [vmem:[#allocation7 + $0x18] sm:$0xf]
    %v219 = vld [vmem:[#allocation7 + $0x1c] sm:$0xf]
    %v220 = vld [vmem:[#allocation7 + $0x20] sm:$0xf]
    %v221 = vld [vmem:[#allocation7 + $0x24] sm:$0xf]
    %v222 = vld [vmem:[#allocation7 + $0x28] sm:$0xf]
    %v223 = vld [vmem:[#allocation7 + $0x2c] sm:$0xf]
    %v224 = vld [vmem:[#allocation7 + $0x30] sm:$0xf]
    %v225 = vld [vmem:[#allocation7 + $0x34] sm:$0xf]
    %v226 = vld [vmem:[#allocation7 + $0x38] sm:$0xf]
    %v227 = vld [vmem:[#allocation7 + $0x3c] sm:$0xf]
    %v228 = vld [vmem:[%s6] sm:$0x1]
    %v230 = vperm.slane %v228, 0
    %v248 = vunpack.c.l.b16 %v212
    %v249 = vunpack.c.l.b16 %v213
    %v250 = vunpack.c.l.b16 %v214
    %v251 = vunpack.c.l.b16 %v215
    %v252 = vunpack.c.l.b16 %v216
    %v253 = vunpack.c.l.b16 %v217
    %v254 = vunpack.c.l.b16 %v218
    %v255 = vunpack.c.l.b16 %v219
    %v256 = vunpack.c.l.b16 %v220
    %v257 = vunpack.c.l.b16 %v221
    %v258 = vunpack.c.l.b16 %v222
    %v259 = vunpack.c.l.b16 %v223
    %v260 = vunpack.c.l.b16 %v224
    %v261 = vunpack.c.l.b16 %v225
    %v262 = vunpack.c.l.b16 %v226
    %v263 = vunpack.c.l.b16 %v227
    %v264 = vpack.c.b16 %v249, %v248
    %v265 = vpack.c.b16 %v251, %v250
    %v266 = vpack.c.b16 %v253, %v252
    %v267 = vpack.c.b16 %v255, %v254
    %v268 = vpack.c.b16 %v257, %v256
    %v269 = vpack.c.b16 %v259, %v258
    %v270 = vpack.c.b16 %v261, %v260
    %v271 = vpack.c.b16 %v263, %v262
    %280 = vmatpush.bf16.msra.mxu0 %v271
    %281 = vmatpush.bf16.msra.mxu0 %v270
    %282 = vmatpush.bf16.msra.mxu0 %v269
    %283 = vmatpush.bf16.msra.mxu0 %v268
    %284 = vmatpush.bf16.msra.mxu0 %v267
    %285 = vmatpush.bf16.msra.mxu0 %v266
    %286 = vmatpush.bf16.msra.mxu0 %v265
    %287 = vmatpush.bf16.msra.mxu0 %v264
    %288 = vmatmul.bf16.gmra.mxu0 %v211
    %v289 = vpop.f32.mrf.mxu0
    %v290 = vadd.f32 %v230, %v289
    %v291 = vpop.f32.mrf.mxu0
    %292 = vdwg.mxu0
    %293 = vst [vmem:[%s7] sm:$0xff] %v290
    // Predicated region
    $region46: #{_rnd_packed_forward.1} parent=1 // pred_check
      _
    $region47: #{_rnd_packed_forward.1} parent=1 // pred_check_branch
      %295 = sbr.rel (0) target = $region49
    $region48: #{_rnd_packed_forward.1} parent=1 // pred_region
      _
    $region49: #{_rnd_packed_forward.1} parent=1 // pred_fallthru
      _
    // Predicated region
    $region50: #{_rnd_packed_forward.1} parent=1 // pred_check
      _
    $region51: #{_rnd_packed_forward.1} parent=1 // pred_check_branch
      %297 = sbr.rel (0) target = $region53
    $region52: #{_rnd_packed_forward.1} parent=1 // pred_region
      _
    $region53: #{_rnd_packed_forward.1} parent=1 // pred_fallthru
      _
    %298 = vsyncpa [#allocation3], 1
    %299 = vsyncpa [#allocation5], 1
    %300 = vsyncpa [#allocation8], 1

</llo_original>
